<compile_context>
chip_gen: v5e
topology: v5e:2x2
jax: 0.10.0
libtpu: 0.0.40
codegen_flags: <defaults>
</compile_context>

<pallas_src>
import functools

import jax
import jax.numpy as jnp
from jax import lax
from jax.experimental import pallas as pl
from jax.experimental.pallas import tpu as pltpu

F32 = jnp.float32
BF16 = jnp.bfloat16
NODE_ALIGN = 256        # node-dim padding: lane-dense + divisible K tiles + MXU width


# ----------------------------------------------------------------------------- helpers

def _round_up(x, m):
    return ((x + m - 1) // m) * m


def _pad_rows(x, m_pad):
    m = x.shape[0]
    if m == m_pad:
        return x
    pad = [(0, m_pad - m)] + [(0, 0)] * (x.ndim - 1)
    return jnp.pad(x, pad)


def _row_tile(m, cap):
    """Largest power-of-two tile <= cap that divides m (m is padded to a mult of 8)."""
    t = cap
    while t >= 8:
        if m % t == 0:
            return t
        t //= 2
    return m


def _k_tile(k, cap):
    """Contraction tile: multiple of 128 dividing k, else the full K (small dims)."""
    if k % 128 != 0:
        return k
    t = cap
    while t >= 128:
        if k % t == 0:
            return t
        t //= 2
    return k


@functools.lru_cache(maxsize=None)
def _tpu_vmem_capacity():
    try:
        return int(pltpu.get_tpu_info().vmem_capacity_bytes)
    except Exception:
        return 64 * 1024 * 1024          # conservative fallback (v7x-sized)


def _vmem_limit_bytes():
    return int(_tpu_vmem_capacity() * 3 // 4)


def _matmul_caps():
    # (row-tile cap, contraction-tile cap), generation aware.
    if _tpu_vmem_capacity() >= 100 * 1024 * 1024:   # v5e / v6e: 128 MiB physical VMEM
        return 512, 2048
    return 256, 1024                                # v7x: 64 MiB physical VMEM


# ----------------------------------------------------------------------------- matmul

def _matmul_kernel(a_ref, b_ref, o_ref, acc_ref, *, relu):
    k = pl.program_id(1)

    @pl.when(k == 0)
    def _():
        acc_ref[...] = jnp.zeros_like(acc_ref)

    acc_ref[...] += jnp.dot(a_ref[...], b_ref[...], preferred_element_type=jnp.float32)

    @pl.when(k == pl.num_programs(1) - 1)
    def _():
        out = acc_ref[...]
        if relu:
            out = jnp.maximum(out, 0.0)
        o_ref[...] = out.astype(o_ref.dtype)


def matmul_act(a, b, relu=False, out_dtype=F32):
    """out = [relu](a @ b); row + contraction tiled, f32 accumulation in VMEM scratch."""
    m, k = a.shape
    _, n = b.shape
    tm_cap, tk_cap = _matmul_caps()
    tm = _row_tile(m, tm_cap)
    tk = _k_tile(k, tk_cap)
    grid = (m // tm, k // tk)
    bytes_acc = (a.size * a.dtype.itemsize
                 + b.size * b.dtype.itemsize * (m // tm)
                 + m * n * jnp.dtype(out_dtype).itemsize)
    return pl.pallas_call(
        functools.partial(_matmul_kernel, relu=relu),
        out_shape=jax.ShapeDtypeStruct((m, n), out_dtype),
        grid=grid,
        in_specs=[pl.BlockSpec((tm, tk), lambda i, kk: (i, kk)),
                  pl.BlockSpec((tk, n), lambda i, kk: (kk, 0))],
        out_specs=pl.BlockSpec((tm, n), lambda i, kk: (i, 0)),
        scratch_shapes=[pltpu.VMEM((tm, n), F32)],
        compiler_params=pltpu.CompilerParams(
            dimension_semantics=("parallel", "arbitrary"),
            vmem_limit_bytes=_vmem_limit_bytes()),
        cost_estimate=pl.CostEstimate(flops=2 * m * k * n, transcendentals=0,
                                      bytes_accessed=int(bytes_acc)),
    )(a, b)


# ----------------------------------------------------------------------------- fused GCN layer 2

def _gcn2_kernel(a_ref, s1_ref, w_ref, o_ref, acc_ref):
    k = pl.program_id(1)

    @pl.when(k == 0)
    def _():
        acc_ref[...] = jnp.zeros_like(acc_ref)

    acc_ref[...] += jnp.dot(a_ref[...], s1_ref[...], preferred_element_type=jnp.float32)

    @pl.when(k == pl.num_programs(1) - 1)
    def _():
        # epilogue: relu of the accumulated A@S1 tile, then the small fused head
        # matmul (weight resident in VMEM) — H never round-trips HBM.
        h = jnp.maximum(acc_ref[...], 0.0).astype(BF16)
        o_ref[...] = jnp.dot(h, w_ref[...],
                             preferred_element_type=jnp.float32).astype(o_ref.dtype)


def gcn_layer2_fused(a, s1, w_bd):
    """s2 = relu(A @ s1) @ w_bd, with the second matmul fused into the epilogue."""
    m, k = a.shape
    _, w1p = s1.shape
    _, w2p = w_bd.shape
    tm_cap, tk_cap = _matmul_caps()
    tm = _row_tile(m, tm_cap)
    tk = _k_tile(k, tk_cap)
    grid = (m // tm, k // tk)
    bytes_acc = (a.size * a.dtype.itemsize
                 + s1.size * s1.dtype.itemsize * (m // tm)
                 + m * w2p * 2)
    return pl.pallas_call(
        _gcn2_kernel,
        out_shape=jax.ShapeDtypeStruct((m, w2p), BF16),
        grid=grid,
        in_specs=[pl.BlockSpec((tm, tk), lambda i, kk: (i, kk)),
                  pl.BlockSpec((tk, w1p), lambda i, kk: (kk, 0)),
                  pl.BlockSpec((w1p, w2p), lambda i, kk: (0, 0))],
        out_specs=pl.BlockSpec((tm, w2p), lambda i, kk: (i, 0)),
        scratch_shapes=[pltpu.VMEM((tm, w1p), F32)],
        compiler_params=pltpu.CompilerParams(
            dimension_semantics=("parallel", "arbitrary"),
            vmem_limit_bytes=_vmem_limit_bytes()),
        cost_estimate=pl.CostEstimate(
            flops=2 * m * k * w1p + 2 * m * w1p * w2p, transcendentals=0,
            bytes_accessed=int(bytes_acc)),
    )(a, s1, w_bd)


# ----------------------------------------------------------------------------- attention

def _attention_kernel(x1_ref, x2_ref, w_ref, b_ref, o_ref):
    x1 = x1_ref[...]
    x2 = x2_ref[...]
    w = w_ref[...]                                   # (1, H) broadcast row
    b = b_ref[0, 0]                                  # SMEM scalar
    s1 = jnp.sum(x1 * w, axis=1, keepdims=True) + b  # VPU lane reduce (no 1-lane MXU)
    s2 = jnp.sum(x2 * w, axis=1, keepdims=True) + b
    m = jnp.maximum(s1, s2)
    e1 = jnp.exp(s1 - m)
    e2 = jnp.exp(s2 - m)
    a1 = e1 * pl.reciprocal(e1 + e2, approx=True)    # EUP slot
    o_ref[...] = a1 * x1 + (1.0 - a1) * x2


def attention(x1, x2, w, b):
    """2-view softmax attention with shared (w, b); row-tiled along the node axis."""
    n, h = x1.shape
    tm = _row_tile(n, 256)
    return pl.pallas_call(
        _attention_kernel,
        out_shape=jax.ShapeDtypeStruct((n, h), F32),
        grid=(n // tm,),
        in_specs=[pl.BlockSpec((tm, h), lambda i: (i, 0)),
                  pl.BlockSpec((tm, h), lambda i: (i, 0)),
                  pl.BlockSpec((1, h), lambda i: (0, 0)),
                  pl.BlockSpec((1, 1), lambda i: (0, 0),
                               memory_space=pltpu.MemorySpace.SMEM)],
        out_specs=pl.BlockSpec((tm, h), lambda i: (i, 0)),
        compiler_params=pltpu.CompilerParams(dimension_semantics=("parallel",)),
    )(x1, x2, w.T, b)


# ----------------------------------------------------------------------------- DiffLoss

def _diff_kernel(x1_ref, x2_ref, o_ref, g_ref):
    i = pl.program_id(0)

    @pl.when(i == 0)
    def _():
        g_ref[...] = jnp.zeros_like(g_ref)

    x1 = x1_ref[...]
    x2 = x2_ref[...]
    n1 = jnp.sqrt(jnp.sum(x1 * x1, axis=1, keepdims=True))
    n2 = jnp.sqrt(jnp.sum(x2 * x2, axis=1, keepdims=True))
    x1n = x1 / (n1 + 1e-6)
    x2n = x2 / (n2 + 1e-6)
    # Gram = x1n^T @ x2n accumulated over row tiles (contract dim 0, no explicit transpose).
    g_ref[...] += lax.dot_general(x1n, x2n, (((0,), (0,)), ((), ())),
                                  preferred_element_type=jnp.float32)

    @pl.when(i == pl.num_programs(0) - 1)
    def _():
        g = g_ref[...]
        o_ref[...] = jnp.mean(g * g, keepdims=True)


def diff_loss(x1, x2):
    m, d1 = x1.shape
    _, d2 = x2.shape
    tm = _row_tile(m, 512)
    return pl.pallas_call(
        _diff_kernel,
        out_shape=jax.ShapeDtypeStruct((1, 1), F32),
        grid=(m // tm,),
        in_specs=[pl.BlockSpec((tm, d1), lambda i: (i, 0)),
                  pl.BlockSpec((tm, d2), lambda i: (i, 0))],
        out_specs=pl.BlockSpec((1, 1), lambda i: (0, 0)),
        scratch_shapes=[pltpu.VMEM((d1, d2), F32)],
        compiler_params=pltpu.CompilerParams(dimension_semantics=("arbitrary",)),
    )(x1, x2)


# ----------------------------------------------------------------------------- grouped linear+BCE

def _lin_bce2_kernel(x_ref, w_ref, b_ref, y_ref, o_ref, acc1, acc2, *, tm, n1, n2):
    i = pl.program_id(0)

    @pl.when(i == 0)
    def _():
        acc1[...] = jnp.zeros_like(acc1)
        acc2[...] = jnp.zeros_like(acc2)

    x = x_ref[...]
    logit = jnp.sum(x * w_ref[...], axis=1, keepdims=True) + b_ref[0, 0]
    y = y_ref[...]
    # stable BCE-with-logits; matches BCE(sigmoid(logit), y).
    loss = (jnp.maximum(logit, 0.0) - logit * y
            + jnp.log(1.0 + jnp.exp(-jnp.abs(logit))))
    row = i * tm + lax.broadcasted_iota(jnp.int32, (tm, 1), 0)
    g1 = (row < n1).astype(F32)
    g2 = jnp.logical_and(row >= n1, row < n1 + n2).astype(F32)
    acc1[...] += jnp.sum(loss * g1, keepdims=True)
    acc2[...] += jnp.sum(loss * g2, keepdims=True)

    @pl.when(i == pl.num_programs(0) - 1)
    def _():
        o_ref[...] = acc1[...] * (1.0 / n1) + acc2[...] * (1.0 / n2)


def lin_bce_two(x, w, b, y, n1, n2):
    """Linear -> sigmoid -> BCE; two row groups (means summed), row-tiled."""
    m, d = x.shape
    mp = _round_up(m, 8)
    x = _pad_rows(x, mp)
    y = _pad_rows(y, mp)
    tm = _row_tile(mp, 256)
    return pl.pallas_call(
        functools.partial(_lin_bce2_kernel, tm=tm, n1=n1, n2=n2),
        out_shape=jax.ShapeDtypeStruct((1, 1), F32),
        grid=(mp // tm,),
        in_specs=[pl.BlockSpec((tm, d), lambda i: (i, 0)),
                  pl.BlockSpec((1, d), lambda i: (0, 0)),
                  pl.BlockSpec((1, 1), lambda i: (0, 0),
                               memory_space=pltpu.MemorySpace.SMEM),
                  pl.BlockSpec((tm, 1), lambda i: (i, 0))],
        out_specs=pl.BlockSpec((1, 1), lambda i: (0, 0)),
        scratch_shapes=[pltpu.VMEM((1, 1), F32), pltpu.VMEM((1, 1), F32)],
        compiler_params=pltpu.CompilerParams(dimension_semantics=("arbitrary",)),
    )(x, w.T, b, y)


# ----------------------------------------------------------------------------- recon pieces

def _edge_bce_kernel(zi_ref, zj_ref, y_ref, o_ref, acc_ref, *, tm, n_edges):
    i = pl.program_id(0)

    @pl.when(i == 0)
    def _():
        acc_ref[...] = jnp.zeros_like(acc_ref)

    # per-edge inner products: only the gathered entries of Z @ Z^T are computed.
    logits = jnp.sum(zi_ref[...] * zj_ref[...], axis=1, keepdims=True)
    y = y_ref[...]
    bce = (jnp.maximum(logits, 0.0) - logits * y
           + jnp.log(1.0 + jnp.exp(-jnp.abs(logits))))
    row = i * tm + lax.broadcasted_iota(jnp.int32, (tm, 1), 0)
    valid = (row < n_edges).astype(F32)
    acc_ref[...] += jnp.sum(bce * valid, keepdims=True)

    @pl.when(i == pl.num_programs(0) - 1)
    def _():
        o_ref[...] = acc_ref[...] * (1.0 / n_edges)


def edge_bce_mean(zi, zj, y, n_edges):
    m, d = zi.shape
    mp = _round_up(m, 8)
    zi = _pad_rows(zi, mp)
    zj = _pad_rows(zj, mp)
    y = _pad_rows(y, mp)
    tm = _row_tile(mp, 512)
    return pl.pallas_call(
        functools.partial(_edge_bce_kernel, tm=tm, n_edges=n_edges),
        out_shape=jax.ShapeDtypeStruct((1, 1), F32),
        grid=(mp // tm,),
        in_specs=[pl.BlockSpec((tm, d), lambda i: (i, 0)),
                  pl.BlockSpec((tm, d), lambda i: (i, 0)),
                  pl.BlockSpec((tm, 1), lambda i: (i, 0))],
        out_specs=pl.BlockSpec((1, 1), lambda i: (0, 0)),
        scratch_shapes=[pltpu.VMEM((1, 1), F32)],
        compiler_params=pltpu.CompilerParams(dimension_semantics=("arbitrary",)),
    )(zi, zj, y)


def _kld_kernel(mu_ref, lv_ref, o_ref, acc_ref, *, tm, n_nodes):
    i = pl.program_id(0)

    @pl.when(i == 0)
    def _():
        acc_ref[...] = jnp.zeros_like(acc_ref)

    mu = mu_ref[...]
    lv = lv_ref[...]
    rows = jnp.sum(1.0 + 2.0 * lv - mu * mu - jnp.exp(2.0 * lv), axis=1, keepdims=True)
    row = i * tm + lax.broadcasted_iota(jnp.int32, (tm, 1), 0)
    valid = (row < n_nodes).astype(F32)
    acc_ref[...] += jnp.sum(rows * valid, keepdims=True)

    @pl.when(i == pl.num_programs(0) - 1)
    def _():
        o_ref[...] = acc_ref[...] * (1.0 / n_nodes)


def kld_mean(mu, lv, n_nodes):
    m, d = mu.shape
    tm = _row_tile(m, 512)
    return pl.pallas_call(
        functools.partial(_kld_kernel, tm=tm, n_nodes=n_nodes),
        out_shape=jax.ShapeDtypeStruct((1, 1), F32),
        grid=(m // tm,),
        in_specs=[pl.BlockSpec((tm, d), lambda i: (i, 0)),
                  pl.BlockSpec((tm, d), lambda i: (i, 0))],
        out_specs=pl.BlockSpec((1, 1), lambda i: (0, 0)),
        scratch_shapes=[pltpu.VMEM((1, 1), F32)],
        compiler_params=pltpu.CompilerParams(dimension_semantics=("arbitrary",)),
    )(mu, lv)


# ----------------------------------------------------------------------------- params / glue

def glorot(key, fan_in, fan_out):
    limit = jnp.sqrt(6.0 / (fan_in + fan_out))
    return jax.random.uniform(key, (fan_in, fan_out), F32, -limit, limit)


def init_encoder(key, nfeat, nhid, nclass):
    k1, k2, k3 = jax.random.split(key, 3)
    return dict(w1=glorot(k1, nfeat, nhid),
                w2=glorot(k2, nhid, nclass),
                w3=glorot(k3, nhid, nclass))


def init_linear(key, din):
    return dict(w=glorot(key, din, 1), b=jnp.zeros((1, 1), F32))


def init_params(key, nfeat, nhid1, nhid2):
    ks = jax.random.split(key, 11)
    return dict(
        priv_s_l=init_encoder(ks[0], nfeat, nhid1, nhid2),
        priv_t_l=init_encoder(ks[1], nfeat, nhid1, nhid2),
        priv_s_g=init_encoder(ks[2], nfeat, nhid1, nhid2),
        priv_t_g=init_encoder(ks[3], nfeat, nhid1, nhid2),
        shared_l=init_encoder(ks[4], nfeat, nhid1, nhid2),
        shared_g=init_encoder(ks[5], nfeat, nhid1, nhid2),
        att=init_linear(ks[6], nhid2),
        att_self_s=init_linear(ks[7], nhid2),
        att_self_t=init_linear(ks[8], nhid2),
        cls=init_linear(ks[9], nhid2 * 2),
        disc=init_linear(ks[10], nhid2),
    )


def edge_index_to_norm_adj(edge_index, n, n_pad):
    """Symmetric-normalized adjacency, padded to n_pad (zero rows/cols), bf16 once."""
    a = jnp.zeros((n_pad, n_pad), F32)
    a = a.at[edge_index[0], edge_index[1]].set(1.0)
    a = jnp.maximum(a, a.T)
    diag = (jnp.arange(n_pad) < n).astype(F32)       # self loops only on real nodes
    a = a + jnp.diag(diag)
    deg = jnp.sum(a, axis=1)
    dinv = jnp.where(deg > 0.0, lax.rsqrt(deg), 0.0)
    return (a * dinv[:, None] * dinv[None, :]).astype(BF16)


def batched_gcn_encoders(enc_params, x_pad, a_pad):
    """K 2-layer GCN(-VAE) encoders sharing (x, A) as two wide GCN layers.

    Layer 1: all W1 concatenated (padded to a 128-multiple width).
    Layer 2: per-encoder [W2|W3] heads on a block-diagonal fused weight, applied
    inside the epilogue of the relu(A@S1) kernel (the extra MXU work is hidden
    under the A-tile DMA; the zero blocks are negligible vs. the N-wide A
    contraction).  Eval-mode reparameterize -> z == mu (deterministic).
    """
    # TODO(synk): stochastic reparameterization sampling and dropout omitted (eval-mode forward).
    k_enc = len(enc_params)
    h1 = enc_params[0]['w1'].shape[1]
    h2 = enc_params[0]['w2'].shape[1]

    w1_cat = jnp.concatenate([p['w1'] for p in enc_params], axis=1)        # (F, K*H1)
    w1p = _round_up(k_enc * h1, 128)
    w1_cat = jnp.pad(w1_cat, ((0, 0), (0, w1p - k_enc * h1))).astype(BF16)

    w2p = _round_up(k_enc * 2 * h2, 128)
    w_bd = jnp.zeros((w1p, w2p), F32)
    for e, p in enumerate(enc_params):
        w23 = jnp.concatenate([p['w2'], p['w3']], axis=1)                  # (H1, 2*H2)
        w_bd = w_bd.at[e * h1:(e + 1) * h1, e * 2 * h2:(e + 1) * 2 * h2].set(w23)
    w_bd = w_bd.astype(BF16)

    s1 = matmul_act(x_pad, w1_cat, out_dtype=BF16)     # X @ W1_cat          (Np, W1p) bf16
    s2 = gcn_layer2_fused(a_pad, s1, w_bd)             # relu(A@S1) @ W_bd   (Np, W2p) bf16
    out = matmul_act(a_pad, s2, out_dtype=F32)         # A @ S2 (fused mu/logvar heads)

    res = []
    for e in range(k_enc):
        mu = out[:, e * 2 * h2: e * 2 * h2 + h2]
        lv = out[:, e * 2 * h2 + h2: (e + 1) * 2 * h2]
        res.append((mu, lv))
    return res


def get_loss_inputs(edge_index, n, key):
    """Deterministic stand-in for the original (randomized) negative sampler."""
    e = int(edge_index.shape[1])
    neg = jax.random.randint(key, (2, e), 0, n, dtype=jnp.int32)
    adj_label = jnp.concatenate([jnp.ones((e,), F32), jnp.zeros((e,), F32)])
    num_edges = float(e)
    pos_weight = (n * n - num_edges) / num_edges
    norm = n * n / ((n * n - num_edges) * 2.0)
    return neg, adj_label, norm, pos_weight


# ----------------------------------------------------------------------------- forward

def asn_lp_forward(params, train_data_s, train_data_t, adj_ds, adj_dt,
                   feats_s, feats_t, num_user_ds, num_user_dt, coeff, neg_key,
                   alpha=1.0):
    n_s, n_t = feats_s.shape[0], feats_t.shape[0]
    np_s, np_t = _round_up(n_s, NODE_ALIGN), _round_up(n_t, NODE_ALIGN)
    A_s = edge_index_to_norm_adj(adj_ds, n_s, np_s)
    A_t = edge_index_to_norm_adj(adj_dt, n_t, np_t)
    x_s = _pad_rows(feats_s, np_s).astype(BF16)
    x_t = _pad_rows(feats_t, np_t).astype(BF16)
    # TODO(synk): 'ppmi'-type encoders should consume a PPMI-transformed adjacency
    # (construction not provided in the reference); the normalized adjacency is reused.

    user_s, item_s = train_data_s[:, 0], train_data_s[:, 1]
    labels_s = train_data_s[:, 2].astype(F32)
    user_t, item_t = train_data_t[:, 0], train_data_t[:, 1]
    labels_t = train_data_t[:, 2].astype(F32)

    src = batched_gcn_encoders(
        [params['priv_s_l'], params['priv_s_g'], params['shared_l'], params['shared_g']],
        x_s, A_s)
    tgt = batched_gcn_encoders(
        [params['priv_t_l'], params['priv_t_g'], params['shared_l'], params['shared_g']],
        x_t, A_t)
    (mu_s, logvar_s), (mu_s_p, logvar_s_p), (enc_s1, enc_s2), (ppmi_s1, ppmi_s2) = src
    (mu_t, logvar_t), (mu_t_p, logvar_t_p), (enc_t1, enc_t2), (ppmi_t1, ppmi_t2) = tgt
    recovered_s, recovered_s_p, z_s, z_s_p = mu_s, mu_s_p, enc_s1, ppmi_s1
    recovered_t, recovered_t_p, z_t, z_t_p = mu_t, mu_t_p, enc_t1, ppmi_t1

    # attention over local/global views; source & target batched (shared w, b).
    x_att = attention(jnp.concatenate([enc_s1, enc_t1], axis=0),
                      jnp.concatenate([ppmi_s1, ppmi_t1], axis=0),
                      params['att']['w'], params['att']['b'])
    x_ds = x_att[:n_s]
    x_dt = x_att[np_s:np_s + n_t]

    # --- non-bipartite branch ---
    user_feats_ds = x_ds[user_s]
    item_feats_ds = x_ds[item_s]
    user_feats_dt = x_dt[user_t]
    item_feats_dt = x_dt[item_t]

    b_s = int(train_data_s.shape[0])
    b_t = int(train_data_t.shape[0])
    cls_in = jnp.concatenate(
        [jnp.concatenate([user_feats_ds, item_feats_ds], axis=1),
         jnp.concatenate([user_feats_dt, item_feats_dt], axis=1)], axis=0)
    y_cls = jnp.concatenate([labels_s, labels_t])[:, None]
    clf_loss = lin_bce_two(cls_in, params['cls']['w'], params['cls']['b'],
                           y_cls, b_s, b_t)[0, 0]

    diff = diff_loss(mu_s, enc_s1)[0, 0] + diff_loss(mu_t, enc_t1)[0, 0]

    att_s = attention(jnp.concatenate([recovered_s, z_s], axis=0),
                      jnp.concatenate([recovered_s_p, z_s_p], axis=0),
                      params['att_self_s']['w'], params['att_self_s']['b'])
    z_cat_s = jnp.concatenate([att_s[:np_s], att_s[np_s:]], axis=1)
    att_t = attention(jnp.concatenate([recovered_t, z_t], axis=0),
                      jnp.concatenate([recovered_t_p, z_t_p], axis=0),
                      params['att_self_t']['w'], params['att_self_t']['b'])
    z_cat_t = jnp.concatenate([att_t[:np_t], att_t[np_t:]], axis=1)

    mu_cat_s = jnp.concatenate([mu_s, mu_s_p, enc_s1, ppmi_s1], axis=1)
    mu_cat_t = jnp.concatenate([mu_t, mu_t_p, enc_t1, ppmi_t1], axis=1)
    logvar_cat_s = jnp.concatenate([logvar_s, logvar_s_p, enc_s2, ppmi_s2], axis=1)
    logvar_cat_t = jnp.concatenate([logvar_t, logvar_t_p, enc_t2, ppmi_t2], axis=1)

    k1, k2 = jax.random.split(neg_key)
    neg_s, adj_label_s, norm_s, _ = get_loss_inputs(adj_ds, num_user_ds, k1)
    neg_t, adj_label_t, norm_t, _ = get_loss_inputs(adj_dt, num_user_dt, k2)
    # Note: pos_weight is computed but, matching the reference recon_loss (which
    # never passes it to binary_cross_entropy_with_logits), it is not applied.

    # only the gathered entries of Z @ Z^T are ever needed -> per-edge dots.
    rows_s = jnp.concatenate([adj_ds[0], neg_s[0]])
    cols_s = jnp.concatenate([adj_ds[1], neg_s[1]])
    rows_t = jnp.concatenate([adj_dt[0], neg_t[0]])
    cols_t = jnp.concatenate([adj_dt[1], neg_t[1]])
    bce_s = edge_bce_mean(z_cat_s[rows_s], z_cat_s[cols_s],
                          adj_label_s[:, None], int(rows_s.shape[0]))[0, 0]
    bce_t = edge_bce_mean(z_cat_t[rows_t], z_cat_t[cols_t],
                          adj_label_t[:, None], int(rows_t.shape[0]))[0, 0]
    kld_s = kld_mean(mu_cat_s, logvar_cat_s, n_s)[0, 0]
    kld_t = kld_mean(mu_cat_t, logvar_cat_t, n_t)[0, 0]
    # n_nodes asymmetry (n_s vs 2*n_t) matches the PyTorch reference call sites.
    recon_loss_s = norm_s * bce_s - 0.5 / n_s * kld_s
    recon_loss_t = norm_t * bce_t - 0.5 / (n_t * 2) * kld_t
    recon_loss = recon_loss_s + recon_loss_t

    # ReverseLayerF is the identity in the forward pass.
    x_disc = jnp.concatenate([user_feats_ds, item_feats_ds,
                              user_feats_dt, item_feats_dt], axis=0)
    n_src = 2 * b_s
    n_tgt = 2 * b_t
    y_disc = jnp.concatenate([jnp.zeros((n_src, 1), F32),
                              jnp.ones((n_tgt, 1), F32)], axis=0)
    domain_loss = lin_bce_two(x_disc, params['disc']['w'], params['disc']['b'],
                              y_disc, n_src, n_tgt)[0, 0]

    return (clf_loss
            + coeff['diff'] * diff
            + coeff['recon'] * recon_loss
            + coeff['domain'] * domain_loss)


# ----------------------------------------------------------------------------- main

if __name__ == "__main__":
    key = jax.random.PRNGKey(0)
    N, F_IN, H1, H2, B, E = 16, 32, 16, 8, 8, 24

    ks = jax.random.split(key, 12)
    feats_s = jax.random.normal(ks[0], (N, F_IN), F32)
    feats_t = jax.random.normal(ks[1], (N, F_IN), F32)
    adj_ds = jax.random.randint(ks[2], (2, E), 0, N, dtype=jnp.int32)
    adj_dt = jax.random.randint(ks[3], (2, E), 0, N, dtype=jnp.int32)
    train_data_s = jnp.stack([jax.random.randint(ks[4], (B,), 0, N),
                              jax.random.randint(ks[5], (B,), 0, N),
                              jax.random.randint(ks[6], (B,), 0, 2)], axis=1).astype(jnp.int32)
    train_data_t = jnp.stack([jax.random.randint(ks[7], (B,), 0, N),
                              jax.random.randint(ks[8], (B,), 0, N),
                              jax.random.randint(ks[9], (B,), 0, 2)], axis=1).astype(jnp.int32)

    params = init_params(ks[10], F_IN, H1, H2)
    coeff = {'diff': 0.5, 'recon': 1.0, 'domain': 1.0}

    loss = asn_lp_forward(params, train_data_s, train_data_t, adj_ds, adj_dt,
                          feats_s, feats_t, N, N, coeff, ks[11], alpha=1.0)
    loss = jax.block_until_ready(loss)
    assert jnp.isfinite(loss), f"non-finite loss: {loss}"
    print("KERNEL_OK")
</pallas_src>

<mosaic_0001>
module attributes {stable_mosaic.version = 11 : i64} {
  func.func @_matmul_kernel(%arg0: i32, %arg1: i32, %arg2: memref<256x32xbf16, #tpu.memory_space<vmem>>, %arg3: memref<32x128xbf16, #tpu.memory_space<vmem>>, %arg4: memref<256x128xbf16, #tpu.memory_space<vmem>>, %arg5: memref<256x128xf32, #tpu.memory_space<vmem>>) attributes {dimension_semantics = [#tpu.dimension_semantics<parallel>, #tpu.dimension_semantics<arbitrary>], iteration_bounds = array<i64: 1, 1>, scalar_prefetch = 0 : i64, scratch_operands = 1 : i64, tpu.core_type = #tpu.core_type<tc>, window_params = [{transform_indices = @transform_0, window_bounds = array<i64: 256, 32>}, {transform_indices = @transform_1, window_bounds = array<i64: 32, 128>}, {transform_indices = @transform_2, window_bounds = array<i64: 256, 128>}]} {
    %c0_i32 = arith.constant 0 : i32
    %0 = arith.cmpi eq, %arg1, %c0_i32 : i32
    %1 = arith.extui %0 : i1 to i32
    %c0_i32_0 = arith.constant 0 : i32
    %2 = arith.cmpi ne, %1, %c0_i32_0 : i32
    scf.if %2 {
      %cst_10 = arith.constant 0.000000e+00 : f32
      %12 = vector.broadcast %cst_10 : f32 to vector<256x128xf32>
      %c0_11 = arith.constant 0 : index
      %c0_12 = arith.constant 0 : index
      %13 = vector.load %arg5[%c0_11, %c0_12] : memref<256x128xf32, #tpu.memory_space<vmem>>, vector<256x128xf32>
      tpu.vector_store %arg5[%c0_11, %c0_12], %12 {strides = array<i32>} : memref<256x128xf32, #tpu.memory_space<vmem>>, vector<256x128xf32>,
    } else {
    }
    %c0 = arith.constant 0 : index
    %c0_1 = arith.constant 0 : index
    %3 = vector.load %arg5[%c0, %c0_1] : memref<256x128xf32, #tpu.memory_space<vmem>>, vector<256x128xf32>
    %c0_2 = arith.constant 0 : index
    %c0_3 = arith.constant 0 : index
    %4 = vector.load %arg2[%c0_2, %c0_3] : memref<256x32xbf16, #tpu.memory_space<vmem>>, vector<256x32xbf16>
    %c0_4 = arith.constant 0 : index
    %c0_5 = arith.constant 0 : index
    %5 = vector.load %arg3[%c0_4, %c0_5] : memref<32x128xbf16, #tpu.memory_space<vmem>>, vector<32x128xbf16>
    %cst = arith.constant dense<0.000000e+00> : vector<256x128xf32>
    %6 = tpu.matmul %4, %5, %cst {dimension_numbers = #tpu.dot_dimension_numbers<[1], [0], [0], [1], [0, 0, 1, 1], [], []>} : vector<256x32xbf16>, vector<32x128xbf16>, vector<256x128xf32> -> vector<256x128xf32>
    %7 = arith.addf %3, %6 : vector<256x128xf32>
    %c0_6 = arith.constant 0 : index
    %c0_7 = arith.constant 0 : index
    %8 = vector.load %arg5[%c0_6, %c0_7] : memref<256x128xf32, #tpu.memory_space<vmem>>, vector<256x128xf32>
    tpu.vector_store %arg5[%c0_6, %c0_7], %7 {strides = array<i32>} : memref<256x128xf32, #tpu.memory_space<vmem>>, vector<256x128xf32>,
    %c0_i32_8 = arith.constant 0 : i32
    %9 = arith.cmpi eq, %arg1, %c0_i32_8 : i32
    %10 = arith.extui %9 : i1 to i32
    %c0_i32_9 = arith.constant 0 : i32
    %11 = arith.cmpi ne, %10, %c0_i32_9 : i32
    scf.if %11 {
      %c0_10 = arith.constant 0 : index
      %c0_11 = arith.constant 0 : index
      %12 = vector.load %arg5[%c0_10, %c0_11] : memref<256x128xf32, #tpu.memory_space<vmem>>, vector<256x128xf32>
      %13 = arith.truncf %12 : vector<256x128xf32> to vector<256x128xbf16>
      %c0_12 = arith.constant 0 : index
      %c0_13 = arith.constant 0 : index
      %14 = vector.load %arg4[%c0_12, %c0_13] : memref<256x128xbf16, #tpu.memory_space<vmem>>, vector<256x128xbf16>
      tpu.vector_store %arg4[%c0_12, %c0_13], %13 {strides = array<i32>} : memref<256x128xbf16, #tpu.memory_space<vmem>>, vector<256x128xbf16>,
    } else {
    }
    return
  }
  func.func @transform_0(%arg0: i32, %arg1: i32) -> (i32, i32) {
    %c0_i32 = arith.constant 0 : i32
    return %arg0, %arg1 : i32, i32
  }
  func.func @transform_1(%arg0: i32, %arg1: i32) -> (i32, i32) {
    %c0_i32 = arith.constant 0 : i32
    %c0_i32_0 = arith.constant 0 : i32
    return %arg1, %c0_i32 : i32, i32
  }
  func.func @transform_2(%arg0: i32, %arg1: i32) -> (i32, i32) {
    %c0_i32 = arith.constant 0 : i32
    %c0_i32_0 = arith.constant 0 : i32
    return %arg0, %c0_i32 : i32, i32
  }
}

</mosaic_0001>

<llo_original>
// kernel: tpu_custom_call.1
$region0: #{tpu_custom_call.1}
  #allocation0 [shape = 'u32[]', space=smem, size = 0x4, offset = 0x4, fixed_abs, tag = 'smem constant byte address 0x4 - core index']
  #allocation1 [shape = 'u32[72,128]{1,0:T(1,128)}', space=vmem, size = 0x9000, scoped, tag = 'internal scratch']
  #allocation2 [shape = 'f32[256,128]{1,0:T(8,128)}', space=vmem, size = 0x20000, scoped, tag = 'scratch operand']
  %s0 = inlined_call_operand.vmem [shape: bf16[256,32], index: 0, kind: input, shape index: {}]
  %s1 = inlined_call_operand.vmem [shape: bf16[32,128], index: 1, kind: input, shape index: {}]
  %s2 = inlined_call_operand.hbm [shape: bf16[256,128], index: 2, kind: output, shape index: {}]
  %s3 = sld [smem:[#allocation0]]
  $region26: #{tpu_custom_call.1} parent=0
    _
  %s5 = ssub.s32 1, %s3
  %s6 = scalar_select 0, %s5, %s3
  $region1: #{tpu_custom_call.1} parent=0
    #allocation3 [shape = 'u8[65536]{0}', space=vmem, size = 0x10000, scoped, tag = 'output window, operand 0, single buffered']
    #allocation4 [shape = 's32[1]{0}', space=sflag, size = 0x4, scoped, tag = 'scoped memory for tpu_custom_call.1']
    %7 = vsyncpa [#allocation4], 0
    // Predicated region
    $region2: #{tpu_custom_call.1} parent=1 // pred_check
      _
    $region3: #{tpu_custom_call.1} parent=1 // pred_check_branch
      %9 = sbr.rel (0) target = $region5
    $region4: #{tpu_custom_call.1} parent=1 // pred_region
      _
    $region5: #{tpu_custom_call.1} parent=1 // pred_fallthru
      _
    // Predicated region
    $region6: #{tpu_custom_call.1} parent=1 // pred_check
      _
    $region7: #{tpu_custom_call.1} parent=1 // pred_check_branch
      %11 = sbr.rel (0) target = $region9
    $region8: #{tpu_custom_call.1} parent=1 // pred_region
      _
    $region9: #{tpu_custom_call.1} parent=1 // pred_fallthru
      _
    %p13 = scmp.eq.s32.totalorder 0, 0
    // Predicated region
    $region10: #{tpu_custom_call.1} parent=1 // pred_check
      %p14 = pneg %p13
    $region11: #{tpu_custom_call.1} parent=1 // pred_check_branch
      %16 = sbr.rel (%p14) target = $region13
    $region12: #{tpu_custom_call.1} parent=1 // pred_region
      %17 = vst [vmem:[#allocation2] sm:$0xff] 0.0
      %18 = vst [vmem:[#allocation2 + $0x8] sm:$0xff] 0.0
      %19 = vst [vmem:[#allocation2 + $0x10] sm:$0xff] 0.0
      %20 = vst [vmem:[#allocation2 + $0x18] sm:$0xff] 0.0
      %21 = vst [vmem:[#allocation2 + $0x20] sm:$0xff] 0.0
      %22 = vst [vmem:[#allocation2 + $0x28] sm:$0xff] 0.0
      %23 = vst [vmem:[#allocation2 + $0x30] sm:$0xff] 0.0
      %24 = vst [vmem:[#allocation2 + $0x38] sm:$0xff] 0.0
      %25 = vst [vmem:[#allocation2 + $0x40] sm:$0xff] 0.0
      %26 = vst [vmem:[#allocation2 + $0x48] sm:$0xff] 0.0
      %27 = vst [vmem:[#allocation2 + $0x50] sm:$0xff] 0.0
      %28 = vst [vmem:[#allocation2 + $0x58] sm:$0xff] 0.0
      %29 = vst [vmem:[#allocation2 + $0x60] sm:$0xff] 0.0
      %30 = vst [vmem:[#allocation2 + $0x68] sm:$0xff] 0.0
      %31 = vst [vmem:[#allocation2 + $0x70] sm:$0xff] 0.0
      %32 = vst [vmem:[#allocation2 + $0x78] sm:$0xff] 0.0
      %33 = vst [vmem:[#allocation2 + $0x80] sm:$0xff] 0.0
      %34 = vst [vmem:[#allocation2 + $0x88] sm:$0xff] 0.0
      %35 = vst [vmem:[#allocation2 + $0x90] sm:$0xff] 0.0
      %36 = vst [vmem:[#allocation2 + $0x98] sm:$0xff] 0.0
      %37 = vst [vmem:[#allocation2 + $0xa0] sm:$0xff] 0.0
      %38 = vst [vmem:[#allocation2 + $0xa8] sm:$0xff] 0.0
      %39 = vst [vmem:[#allocation2 + $0xb0] sm:$0xff] 0.0
      %40 = vst [vmem:[#allocation2 + $0xb8] sm:$0xff] 0.0
      %41 = vst [vmem:[#allocation2 + $0xc0] sm:$0xff] 0.0
      %42 = vst [vmem:[#allocation2 + $0xc8] sm:$0xff] 0.0
      %43 = vst [vmem:[#allocation2 + $0xd0] sm:$0xff] 0.0
      %44 = vst [vmem:[#allocation2 + $0xd8] sm:$0xff] 0.0
      %45 = vst [vmem:[#allocation2 + $0xe0] sm:$0xff] 0.0
      %46 = vst [vmem:[#allocation2 + $0xe8] sm:$0xff] 0.0
      %47 = vst [vmem:[#allocation2 + $0xf0] sm:$0xff] 0.0
      %48 = vst [vmem:[#allocation2 + $0xf8] sm:$0xff] 0.0
    $region13: #{tpu_custom_call.1} parent=1 // pred_fallthru
      _
    %v49 = vld [vmem:[#allocation2] sm:$0xff]
    %v50 = vld [vmem:[#allocation2 + $0x8] sm:$0xff]
    %v51 = vld [vmem:[#allocation2 + $0x10] sm:$0xff]
    %v52 = vld [vmem:[#allocation2 + $0x18] sm:$0xff]
    %v53 = vld [vmem:[#allocation2 + $0x20] sm:$0xff]
    %v54 = vld [vmem:[#allocation2 + $0x28] sm:$0xff]
    %v55 = vld [vmem:[#allocation2 + $0x30] sm:$0xff]
    %v56 = vld [vmem:[#allocation2 + $0x38] sm:$0xff]
    %v57 = vld [vmem:[#allocation2 + $0x40] sm:$0xff]
    %v58 = vld [vmem:[#allocation2 + $0x48] sm:$0xff]
    %v59 = vld [vmem:[#allocation2 + $0x50] sm:$0xff]
    %v60 = vld [vmem:[#allocation2 + $0x58] sm:$0xff]
    %v61 = vld [vmem:[#allocation2 + $0x60] sm:$0xff]
    %v62 = vld [vmem:[#allocation2 + $0x68] sm:$0xff]
    %v63 = vld [vmem:[#allocation2 + $0x70] sm:$0xff]
    %v64 = vld [vmem:[#allocation2 + $0x78] sm:$0xff]
    %v65 = vld [vmem:[#allocation2 + $0x80] sm:$0xff]
    %v66 = vld [vmem:[#allocation2 + $0x88] sm:$0xff]
    %v67 = vld [vmem:[#allocation2 + $0x90] sm:$0xff]
    %v68 = vld [vmem:[#allocation2 + $0x98] sm:$0xff]
    %v69 = vld [vmem:[#allocation2 + $0xa0] sm:$0xff]
    %v70 = vld [vmem:[#allocation2 + $0xa8] sm:$0xff]
    %v71 = vld [vmem:[#allocation2 + $0xb0] sm:$0xff]
    %v72 = vld [vmem:[#allocation2 + $0xb8] sm:$0xff]
    %v73 = vld [vmem:[#allocation2 + $0xc0] sm:$0xff]
    %v74 = vld [vmem:[#allocation2 + $0xc8] sm:$0xff]
    %v75 = vld [vmem:[#allocation2 + $0xd0] sm:$0xff]
    %v76 = vld [vmem:[#allocation2 + $0xd8] sm:$0xff]
    %v77 = vld [vmem:[#allocation2 + $0xe0] sm:$0xff]
    %v78 = vld [vmem:[#allocation2 + $0xe8] sm:$0xff]
    %v79 = vld [vmem:[#allocation2 + $0xf0] sm:$0xff]
    %v80 = vld [vmem:[#allocation2 + $0xf8] sm:$0xff]
    %v81 = vld [vmem:[%s0] sm:$0xf]
    %v82 = vld [vmem:[%s0 + $0x4] sm:$0xf]
    %v83 = vld [vmem:[%s0 + $0x8] sm:$0xf]
    %v84 = vld [vmem:[%s0 + $0xc] sm:$0xf]
    %v85 = vld [vmem:[%s0 + $0x10] sm:$0xf]
    %v86 = vld [vmem:[%s0 + $0x14] sm:$0xf]
    %v87 = vld [vmem:[%s0 + $0x18] sm:$0xf]
    %v88 = vld [vmem:[%s0 + $0x1c] sm:$0xf]
    %v89 = vld [vmem:[%s0 + $0x20] sm:$0xf]
    %v90 = vld [vmem:[%s0 + $0x24] sm:$0xf]
    %v91 = vld [vmem:[%s0 + $0x28] sm:$0xf]
    %v92 = vld [vmem:[%s0 + $0x2c] sm:$0xf]
    %v93 = vld [vmem:[%s0 + $0x30] sm:$0xf]
    %v94 = vld [vmem:[%s0 + $0x34] sm:$0xf]
    %v95 = vld [vmem:[%s0 + $0x38] sm:$0xf]
    %v96 = vld [vmem:[%s0 + $0x3c] sm:$0xf]
    %v97 = vld [vmem:[%s0 + $0x40] sm:$0xf]
    %v98 = vld [vmem:[%s0 + $0x44] sm:$0xf]
    %v99 = vld [vmem:[%s0 + $0x48] sm:$0xf]
    %v100 = vld [vmem:[%s0 + $0x4c] sm:$0xf]
    %v101 = vld [vmem:[%s0 + $0x50] sm:$0xf]
    %v102 = vld [vmem:[%s0 + $0x54] sm:$0xf]
    %v103 = vld [vmem:[%s0 + $0x58] sm:$0xf]
    %v104 = vld [vmem:[%s0 + $0x5c] sm:$0xf]
    %v105 = vld [vmem:[%s0 + $0x60] sm:$0xf]
    %v106 = vld [vmem:[%s0 + $0x64] sm:$0xf]
    %v107 = vld [vmem:[%s0 + $0x68] sm:$0xf]
    %v108 = vld [vmem:[%s0 + $0x6c] sm:$0xf]
    %v109 = vld [vmem:[%s0 + $0x70] sm:$0xf]
    %v110 = vld [vmem:[%s0 + $0x74] sm:$0xf]
    %v111 = vld [vmem:[%s0 + $0x78] sm:$0xf]
    %v112 = vld [vmem:[%s0 + $0x7c] sm:$0xf]
    %v113 = vld [vmem:[%s1] sm:$0xf]
    %v114 = vld [vmem:[%s1 + $0x4] sm:$0xf]
    %v115 = vld [vmem:[%s1 + $0x8] sm:$0xf]
    %v116 = vld [vmem:[%s1 + $0xc] sm:$0xf]
    %v149 = vunpack.c.l.b16 %v81
    %v150 = vunpack.c.l.b16 %v82
    %v151 = vunpack.c.l.b16 %v83
    %v152 = vunpack.c.l.b16 %v84
    %v153 = vunpack.c.l.b16 %v85
    %v154 = vunpack.c.l.b16 %v86
    %v155 = vunpack.c.l.b16 %v87
    %v156 = vunpack.c.l.b16 %v88
    %v157 = vunpack.c.l.b16 %v89
    %v158 = vunpack.c.l.b16 %v90
    %v159 = vunpack.c.l.b16 %v91
    %v160 = vunpack.c.l.b16 %v92
    %v161 = vunpack.c.l.b16 %v93
    %v162 = vunpack.c.l.b16 %v94
    %v163 = vunpack.c.l.b16 %v95
    %v164 = vunpack.c.l.b16 %v96
    %v165 = vunpack.c.l.b16 %v97
    %v166 = vunpack.c.l.b16 %v98
    %v167 = vunpack.c.l.b16 %v99
    %v168 = vunpack.c.l.b16 %v100
    %v169 = vunpack.c.l.b16 %v101
    %v170 = vunpack.c.l.b16 %v102
    %v171 = vunpack.c.l.b16 %v103
    %v172 = vunpack.c.l.b16 %v104
    %v173 = vunpack.c.l.b16 %v105
    %v174 = vunpack.c.l.b16 %v106
    %v175 = vunpack.c.l.b16 %v107
    %v176 = vunpack.c.l.b16 %v108
    %v177 = vunpack.c.l.b16 %v109
    %v178 = vunpack.c.l.b16 %v110
    %v179 = vunpack.c.l.b16 %v111
    %v180 = vunpack.c.l.b16 %v112
    %v181 = vpack.c.b16 %v150, %v149
    %v182 = vpack.c.b16 %v152, %v151
    %v183 = vpack.c.b16 %v154, %v153
    %v184 = vpack.c.b16 %v156, %v155
    %v185 = vpack.c.b16 %v158, %v157
    %v186 = vpack.c.b16 %v160, %v159
    %v187 = vpack.c.b16 %v162, %v161
    %v188 = vpack.c.b16 %v164, %v163
    %v189 = vpack.c.b16 %v166, %v165
    %v190 = vpack.c.b16 %v168, %v167
    %v191 = vpack.c.b16 %v170, %v169
    %v192 = vpack.c.b16 %v172, %v171
    %v193 = vpack.c.b16 %v174, %v173
    %v194 = vpack.c.b16 %v176, %v175
    %v195 = vpack.c.b16 %v178, %v177
    %v196 = vpack.c.b16 %v180, %v179
    %v201 = vunpack.c.l.b16 %v113
    %v202 = vunpack.c.l.b16 %v114
    %v203 = vunpack.c.l.b16 %v115
    %v204 = vunpack.c.l.b16 %v116
    %v205 = vpack.c.b16 %v202, %v201
    %v206 = vpack.c.b16 %v204, %v203
    %vm209 = vcmask 261120
    %v211 = vsel %vm209, %v181, 0
    %v214 = vsel %vm209, %v182, 0
    %v217 = vsel %vm209, %v183, 0
    %v220 = vsel %vm209, %v184, 0
    %v223 = vsel %vm209, %v185, 0
    %v226 = vsel %vm209, %v186, 0
    %v229 = vsel %vm209, %v187, 0
    %v232 = vsel %vm209, %v188, 0
    %v235 = vsel %vm209, %v189, 0
    %v238 = vsel %vm209, %v190, 0
    %v241 = vsel %vm209, %v191, 0
    %v244 = vsel %vm209, %v192, 0
    %v247 = vsel %vm209, %v193, 0
    %v250 = vsel %vm209, %v194, 0
    %v253 = vsel %vm209, %v195, 0
    %v256 = vsel %vm209, %v196, 0
    %258 = vmatpush.bf16.msra.mxu0 0
    %259 = vmatpush.bf16.msra.mxu0 0
    %260 = vmatpush.bf16.msra.mxu0 0
    %261 = vmatpush.bf16.msra.mxu0 0
    %262 = vmatpush.bf16.msra.mxu0 0
    %263 = vmatpush.bf16.msra.mxu0 0
    %264 = vmatpush.bf16.msra.mxu0 %v206
    %265 = vmatpush.bf16.msra.mxu0 %v205
    %266 = vmatmul.bf16.gmra.mxu0 %v211
    %v267 = vpop.f32.mrf.mxu0
    %v268 = vadd.f32 0.0, %v267
    %v269 = vpop.f32.mrf.mxu0
    %v270 = vadd.f32 0.0, %v269
    %271 = vmatmul.bf16.gmra.mxu0 %v214
    %v272 = vpop.f32.mrf.mxu0
    %v273 = vadd.f32 0.0, %v272
    %v274 = vpop.f32.mrf.mxu0
    %v275 = vadd.f32 0.0, %v274
    %276 = vmatmul.bf16.gmra.mxu0 %v217
    %v277 = vpop.f32.mrf.mxu0
    %v278 = vadd.f32 0.0, %v277
    %v279 = vpop.f32.mrf.mxu0
    %v280 = vadd.f32 0.0, %v279
    %281 = vmatmul.bf16.gmra.mxu0 %v220
    %v282 = vpop.f32.mrf.mxu0
    %v283 = vadd.f32 0.0, %v282
    %v284 = vpop.f32.mrf.mxu0
    %v285 = vadd.f32 0.0, %v284
    %286 = vmatmul.bf16.gmra.mxu0 %v223
    %v287 = vpop.f32.mrf.mxu0
    %v288 = vadd.f32 0.0, %v287
    %v289 = vpop.f32.mrf.mxu0
    %v290 = vadd.f32 0.0, %v289
    %291 = vmatmul.bf16.gmra.mxu0 %v226
    %v292 = vpop.f32.mrf.mxu0
    %v293 = vadd.f32 0.0, %v292
    %v294 = vpop.f32.mrf.mxu0
    %v295 = vadd.f32 0.0, %v294
    %296 = vmatmul.bf16.gmra.mxu0 %v229
    %v297 = vpop.f32.mrf.mxu0
    %v298 = vadd.f32 0.0, %v297
    %v299 = vpop.f32.mrf.mxu0
    %v300 = vadd.f32 0.0, %v299
    %301 = vmatmul.bf16.gmra.mxu0 %v232
    %v302 = vpop.f32.mrf.mxu0
    %v303 = vadd.f32 0.0, %v302
    %v304 = vpop.f32.mrf.mxu0
    %v305 = vadd.f32 0.0, %v304
    %306 = vmatmul.bf16.gmra.mxu0 %v235
    %v307 = vpop.f32.mrf.mxu0
    %v308 = vadd.f32 0.0, %v307
    %v309 = vpop.f32.mrf.mxu0
    %v310 = vadd.f32 0.0, %v309
    %311 = vmatmul.bf16.gmra.mxu0 %v238
    %v312 = vpop.f32.mrf.mxu0
    %v313 = vadd.f32 0.0, %v312
    %v314 = vpop.f32.mrf.mxu0
    %v315 = vadd.f32 0.0, %v314
    %316 = vmatmul.bf16.gmra.mxu0 %v241
    %v317 = vpop.f32.mrf.mxu0
    %v318 = vadd.f32 0.0, %v317
    %v319 = vpop.f32.mrf.mxu0
    %v320 = vadd.f32 0.0, %v319
    %321 = vmatmul.bf16.gmra.mxu0 %v244
    %v322 = vpop.f32.mrf.mxu0
    %v323 = vadd.f32 0.0, %v322
    %v324 = vpop.f32.mrf.mxu0
    %v325 = vadd.f32 0.0, %v324
    %326 = vmatmul.bf16.gmra.mxu0 %v247
    %v327 = vpop.f32.mrf.mxu0
    %v328 = vadd.f32 0.0, %v327
    %v329 = vpop.f32.mrf.mxu0
    %v330 = vadd.f32 0.0, %v329
    %331 = vmatmul.bf16.gmra.mxu0 %v250
    %v332 = vpop.f32.mrf.mxu0
    %v333 = vadd.f32 0.0, %v332
    %v334 = vpop.f32.mrf.mxu0
    %v335 = vadd.f32 0.0, %v334
    %336 = vmatmul.bf16.gmra.mxu0 %v253
    %v337 = vpop.f32.mrf.mxu0
    %v338 = vadd.f32 0.0, %v337
    %v339 = vpop.f32.mrf.mxu0
    %v340 = vadd.f32 0.0, %v339
    %341 = vmatmul.bf16.gmra.mxu0 %v256
    %v342 = vpop.f32.mrf.mxu0
    %v343 = vadd.f32 0.0, %v342
    %v344 = vpop.f32.mrf.mxu0
    %v345 = vadd.f32 0.0, %v344
    %346 = vdwg.mxu0
    %v347 = vadd.f32 %v49, %v268
    %v348 = vadd.f32 %v50, %v270
    %v349 = vadd.f32 %v51, %v273
    %v350 = vadd.f32 %v52, %v275
    %v351 = vadd.f32 %v53, %v278
    %v352 = vadd.f32 %v54, %v280
    %v353 = vadd.f32 %v55, %v283
    %v354 = vadd.f32 %v56, %v285
    %v355 = vadd.f32 %v57, %v288
    %v356 = vadd.f32 %v58, %v290
    %v357 = vadd.f32 %v59, %v293
    %v358 = vadd.f32 %v60, %v295
    %v359 = vadd.f32 %v61, %v298
    %v360 = vadd.f32 %v62, %v300
    %v361 = vadd.f32 %v63, %v303
    %v362 = vadd.f32 %v64, %v305
    %v363 = vadd.f32 %v65, %v308
    %v364 = vadd.f32 %v66, %v310
    %v365 = vadd.f32 %v67, %v313
    %v366 = vadd.f32 %v68, %v315
    %v367 = vadd.f32 %v69, %v318
    %v368 = vadd.f32 %v70, %v320
    %v369 = vadd.f32 %v71, %v323
    %v370 = vadd.f32 %v72, %v325
    %v371 = vadd.f32 %v73, %v328
    %v372 = vadd.f32 %v74, %v330
    %v373 = vadd.f32 %v75, %v333
    %v374 = vadd.f32 %v76, %v335
    %v375 = vadd.f32 %v77, %v338
    %v376 = vadd.f32 %v78, %v340
    %v377 = vadd.f32 %v79, %v343
    %v378 = vadd.f32 %v80, %v345
    %379 = vst [vmem:[#allocation2] sm:$0xff] %v347
    %380 = vst [vmem:[#allocation2 + $0x8] sm:$0xff] %v348
    %381 = vst [vmem:[#allocation2 + $0x10] sm:$0xff] %v349
    %382 = vst [vmem:[#allocation2 + $0x18] sm:$0xff] %v350
    %383 = vst [vmem:[#allocation2 + $0x20] sm:$0xff] %v351
    %384 = vst [vmem:[#allocation2 + $0x28] sm:$0xff] %v352
    %385 = vst [vmem:[#allocation2 + $0x30] sm:$0xff] %v353
    %386 = vst [vmem:[#allocation2 + $0x38] sm:$0xff] %v354
    %387 = vst [vmem:[#allocation2 + $0x40] sm:$0xff] %v355
    %388 = vst [vmem:[#allocation2 + $0x48] sm:$0xff] %v356
    %389 = vst [vmem:[#allocation2 + $0x50] sm:$0xff] %v357
    %390 = vst [vmem:[#allocation2 + $0x58] sm:$0xff] %v358
    %391 = vst [vmem:[#allocation2 + $0x60] sm:$0xff] %v359
    %392 = vst [vmem:[#allocation2 + $0x68] sm:$0xff] %v360
    %393 = vst [vmem:[#allocation2 + $0x70] sm:$0xff] %v361
    %394 = vst [vmem:[#allocation2 + $0x78] sm:$0xff] %v362
    %395 = vst [vmem:[#allocation2 + $0x80] sm:$0xff] %v363
    %396 = vst [vmem:[#allocation2 + $0x88] sm:$0xff] %v364
    %397 = vst [vmem:[#allocation2 + $0x90] sm:$0xff] %v365
    %398 = vst [vmem:[#allocation2 + $0x98] sm:$0xff] %v366
    %399 = vst [vmem:[#allocation2 + $0xa0] sm:$0xff] %v367
    %400 = vst [vmem:[#allocation2 + $0xa8] sm:$0xff] %v368
    %401 = vst [vmem:[#allocation2 + $0xb0] sm:$0xff] %v369
    %402 = vst [vmem:[#allocation2 + $0xb8] sm:$0xff] %v370
    %403 = vst [vmem:[#allocation2 + $0xc0] sm:$0xff] %v371
    %404 = vst [vmem:[#allocation2 + $0xc8] sm:$0xff] %v372
    %405 = vst [vmem:[#allocation2 + $0xd0] sm:$0xff] %v373
    %406 = vst [vmem:[#allocation2 + $0xd8] sm:$0xff] %v374
    %407 = vst [vmem:[#allocation2 + $0xe0] sm:$0xff] %v375
    %408 = vst [vmem:[#allocation2 + $0xe8] sm:$0xff] %v376
    %409 = vst [vmem:[#allocation2 + $0xf0] sm:$0xff] %v377
    %410 = vst [vmem:[#allocation2 + $0xf8] sm:$0xff] %v378
    // Predicated region
    $region14: #{tpu_custom_call.1} parent=1 // pred_check
      %p411 = pneg %p13
    $region15: #{tpu_custom_call.1} parent=1 // pred_check_branch
      %413 = sbr.rel (%p411) target = $region17
    $region16: #{tpu_custom_call.1} parent=1 // pred_region
      %v414 = vld [vmem:[#allocation2] sm:$0xff]
      %v415 = vld [vmem:[#allocation2 + $0x8] sm:$0xff]
      %v416 = vld [vmem:[#allocation2 + $0x10] sm:$0xff]
      %v417 = vld [vmem:[#allocation2 + $0x18] sm:$0xff]
      %v418 = vld [vmem:[#allocation2 + $0x20] sm:$0xff]
      %v419 = vld [vmem:[#allocation2 + $0x28] sm:$0xff]
      %v420 = vld [vmem:[#allocation2 + $0x30] sm:$0xff]
      %v421 = vld [vmem:[#allocation2 + $0x38] sm:$0xff]
      %v422 = vld [vmem:[#allocation2 + $0x40] sm:$0xff]
      %v423 = vld [vmem:[#allocation2 + $0x48] sm:$0xff]
      %v424 = vld [vmem:[#allocation2 + $0x50] sm:$0xff]
      %v425 = vld [vmem:[#allocation2 + $0x58] sm:$0xff]
      %v426 = vld [vmem:[#allocation2 + $0x60] sm:$0xff]
      %v427 = vld [vmem:[#allocation2 + $0x68] sm:$0xff]
      %v428 = vld [vmem:[#allocation2 + $0x70] sm:$0xff]
      %v429 = vld [vmem:[#allocation2 + $0x78] sm:$0xff]
      %v430 = vld [vmem:[#allocation2 + $0x80] sm:$0xff]
      %v431 = vld [vmem:[#allocation2 + $0x88] sm:$0xff]
      %v432 = vld [vmem:[#allocation2 + $0x90] sm:$0xff]
      %v433 = vld [vmem:[#allocation2 + $0x98] sm:$0xff]
      %v434 = vld [vmem:[#allocation2 + $0xa0] sm:$0xff]
      %v435 = vld [vmem:[#allocation2 + $0xa8] sm:$0xff]
      %v436 = vld [vmem:[#allocation2 + $0xb0] sm:$0xff]
      %v437 = vld [vmem:[#allocation2 + $0xb8] sm:$0xff]
      %v438 = vld [vmem:[#allocation2 + $0xc0] sm:$0xff]
      %v439 = vld [vmem:[#allocation2 + $0xc8] sm:$0xff]
      %v440 = vld [vmem:[#allocation2 + $0xd0] sm:$0xff]
      %v441 = vld [vmem:[#allocation2 + $0xd8] sm:$0xff]
      %v442 = vld [vmem:[#allocation2 + $0xe0] sm:$0xff]
      %v443 = vld [vmem:[#allocation2 + $0xe8] sm:$0xff]
      %v444 = vld [vmem:[#allocation2 + $0xf0] sm:$0xff]
      %v445 = vld [vmem:[#allocation2 + $0xf8] sm:$0xff]
      %v446 = vpack.c.bf16 %v414, %v414
      %v447 = vpack.c.bf16 %v415, %v415
      %v448 = vpack.c.bf16 %v416, %v416
      %v449 = vpack.c.bf16 %v417, %v417
      %v450 = vpack.c.bf16 %v418, %v418
      %v451 = vpack.c.bf16 %v419, %v419
      %v452 = vpack.c.bf16 %v420, %v420
      %v453 = vpack.c.bf16 %v421, %v421
      %v454 = vpack.c.bf16 %v422, %v422
      %v455 = vpack.c.bf16 %v423, %v423
      %v456 = vpack.c.bf16 %v424, %v424
      %v457 = vpack.c.bf16 %v425, %v425
      %v458 = vpack.c.bf16 %v426, %v426
      %v459 = vpack.c.bf16 %v427, %v427
      %v460 = vpack.c.bf16 %v428, %v428
      %v461 = vpack.c.bf16 %v429, %v429
      %v462 = vpack.c.bf16 %v430, %v430
      %v463 = vpack.c.bf16 %v431, %v431
      %v464 = vpack.c.bf16 %v432, %v432
      %v465 = vpack.c.bf16 %v433, %v433
      %v466 = vpack.c.bf16 %v434, %v434
      %v467 = vpack.c.bf16 %v435, %v435
      %v468 = vpack.c.bf16 %v436, %v436
      %v469 = vpack.c.bf16 %v437, %v437
      %v470 = vpack.c.bf16 %v438, %v438
      %v471 = vpack.c.bf16 %v439, %v439
      %v472 = vpack.c.bf16 %v440, %v440
      %v473 = vpack.c.bf16 %v441, %v441
      %v474 = vpack.c.bf16 %v442, %v442
      %v475 = vpack.c.bf16 %v443, %v443
      %v476 = vpack.c.bf16 %v444, %v444
      %v477 = vpack.c.bf16 %v445, %v445
      %478 = vst [vmem:[#allocation3] sm:$0xf] %v446
      %479 = vst [vmem:[#allocation3 + $0x4] sm:$0xf] %v447
      %480 = vst [vmem:[#allocation3 + $0x8] sm:$0xf] %v448
      %481 = vst [vmem:[#allocation3 + $0xc] sm:$0xf] %v449
      %482 = vst [vmem:[#allocation3 + $0x10] sm:$0xf] %v450
      %483 = vst [vmem:[#allocation3 + $0x14] sm:$0xf] %v451
      %484 = vst [vmem:[#allocation3 + $0x18] sm:$0xf] %v452
      %485 = vst [vmem:[#allocation3 + $0x1c] sm:$0xf] %v453
      %486 = vst [vmem:[#allocation3 + $0x20] sm:$0xf] %v454
      %487 = vst [vmem:[#allocation3 + $0x24] sm:$0xf] %v455
      %488 = vst [vmem:[#allocation3 + $0x28] sm:$0xf] %v456
      %489 = vst [vmem:[#allocation3 + $0x2c] sm:$0xf] %v457
      %490 = vst [vmem:[#allocation3 + $0x30] sm:$0xf] %v458
      %491 = vst [vmem:[#allocation3 + $0x34] sm:$0xf] %v459
      %492 = vst [vmem:[#allocation3 + $0x38] sm:$0xf] %v460
      %493 = vst [vmem:[#allocation3 + $0x3c] sm:$0xf] %v461
      %494 = vst [vmem:[#allocation3 + $0x40] sm:$0xf] %v462
      %495 = vst [vmem:[#allocation3 + $0x44] sm:$0xf] %v463
      %496 = vst [vmem:[#allocation3 + $0x48] sm:$0xf] %v464
      %497 = vst [vmem:[#allocation3 + $0x4c] sm:$0xf] %v465
      %498 = vst [vmem:[#allocation3 + $0x50] sm:$0xf] %v466
      %499 = vst [vmem:[#allocation3 + $0x54] sm:$0xf] %v467
      %500 = vst [vmem:[#allocation3 + $0x58] sm:$0xf] %v468
      %501 = vst [vmem:[#allocation3 + $0x5c] sm:$0xf] %v469
      %502 = vst [vmem:[#allocation3 + $0x60] sm:$0xf] %v470
      %503 = vst [vmem:[#allocation3 + $0x64] sm:$0xf] %v471
      %504 = vst [vmem:[#allocation3 + $0x68] sm:$0xf] %v472
      %505 = vst [vmem:[#allocation3 + $0x6c] sm:$0xf] %v473
      %506 = vst [vmem:[#allocation3 + $0x70] sm:$0xf] %v474
      %507 = vst [vmem:[#allocation3 + $0x74] sm:$0xf] %v475
      %508 = vst [vmem:[#allocation3 + $0x78] sm:$0xf] %v476
      %509 = vst [vmem:[#allocation3 + $0x7c] sm:$0xf] %v477
    $region17: #{tpu_custom_call.1} parent=1 // pred_fallthru
      _
    // Predicated region
    $region18: #{tpu_custom_call.1} parent=1 // pred_check
      _
    $region19: #{tpu_custom_call.1} parent=1 // pred_check_branch
      %511 = sbr.rel (0) target = $region21
    $region20: #{tpu_custom_call.1} parent=1 // pred_region
      %513 = vsyncadd [#allocation4], 0
      %s514 = sshll.u32 [#allocation3], 4
      %s515 = int_to_ptr.vmem [resolvable:$true] %s514
      %s516 = sshll.u32 %s2, 4
      %s517 = int_to_ptr.hbm [resolvable:$true] %s516
      %522 = dma.vmem_to_hbm [thread:$0]  %s515, 2048, %s517, [#allocation4], 64, 64, 4
    $region21: #{tpu_custom_call.1} parent=1 // pred_fallthru
      _
    // Predicated region
    $region22: #{tpu_custom_call.1} parent=1 // pred_check
      _
    $region23: #{tpu_custom_call.1} parent=1 // pred_check_branch
      %524 = sbr.rel (0) target = $region25
    $region24: #{tpu_custom_call.1} parent=1 // pred_region
      %526 = dma.done [#allocation4], 2048
    $region25: #{tpu_custom_call.1} parent=1 // pred_fallthru
      _
    %527 = vsyncpa [#allocation4], 1

</llo_original>
